<compile_context>
chip_gen: v5e
topology: v5e:2x2
jax: 0.10.0
libtpu: 0.0.40
codegen_flags: <defaults>
</compile_context>

<pallas_src>
import jax
import jax.numpy as jnp
from jax import lax
from jax.experimental import pallas as pl
from jax.experimental.pallas import tpu as pltpu


TILE_B_MAX = 16384                     # rows of x per grid step (sweepable)
VMEM_LIMIT_BYTES = 32 * 1024 * 1024    # > v5e's 16 MiB default, <= every gen's physical


def _round_up(n: int, m: int) -> int:
    return ((n + m - 1) // m) * m


def _choose_tiling(batch: int):
    """Return (tile_b, b_pad): tile_b divides b_pad; tiles are lane-dense."""
    if batch < 4096:
        # Small batch: a single grid step; block shape == full (padded) array,
        # so the (8, 128) divisibility rule is satisfied trivially.
        b_pad = _round_up(max(batch, 1), 16)
        return b_pad, b_pad
    # Large batch: tiles are multiples of 128 (unmasked (C_pad, tile_b) stores)
    # and the grid has >= 2 steps so both v7x TensorCores get work.
    cap = max(128, min(TILE_B_MAX, (batch // 2) // 128 * 128))
    # Prefer a tile that divides batch exactly -> skip the jnp.pad pass over x.
    for t in range(cap, 127, -128):
        if batch % t == 0:
            return t, batch
    return cap, _round_up(batch, cap)


def tracknet_kernel(x_ref, w1_ref, b1_ref, w2_ref, b2_ref, w3t_ref, b3t_ref, o_ref):
    """One tile_b-row slab of the 3-layer MLP. Weights are VMEM-resident."""
    # x streamed as f32 from HBM; cast to bf16 in-kernel (no wrapper cast pass).
    x = x_ref[...].astype(jnp.bfloat16)                       # (tile_b, D_in)
    # Layer 1: bf16 MXU matmul, f32 accumulate, f32 bias + ReLU (VPU).
    h1 = jnp.dot(x, w1_ref[...], preferred_element_type=jnp.float32) + b1_ref[...]
    h1 = jnp.maximum(h1, 0.0)
    # Layer 2.
    h2 = jnp.dot(h1.astype(jnp.bfloat16), w2_ref[...],
                 preferred_element_type=jnp.float32) + b2_ref[...]
    h2 = jnp.maximum(h2, 0.0)
    # Layer 3, transposed/narrow: (C_pad, H) contracted with (tile_b, H) on H
    # -> (C_pad, tile_b) lane-dense output slab (only 8 f32 per batch row).
    out = lax.dot_general(
        w3t_ref[...], h2.astype(jnp.bfloat16),
        dimension_numbers=(((1,), (1,)), ((), ())),
        preferred_element_type=jnp.float32) + b3t_ref[...]
    o_ref[...] = out


def tracknet_forward(x, params, tile_b=None):
    """x: (B, input_dim) float32. params: w* are (in, out), b* are (1, out)."""
    B, input_dim = x.shape
    hidden = params["w1"].shape[1]
    num_classes = params["w3"].shape[1]
    c_pad = _round_up(num_classes, 8)

    if tile_b is None:
        tile_b, b_pad = _choose_tiling(B)
    else:
        b_pad = _round_up(B, tile_b)

    # Pad batch only when the chosen tile doesn't divide it (extra rows are
    # zeros and their output columns are discarded below).
    x_p = x if b_pad == B else jnp.pad(x, ((0, b_pad - B), (0, 0)))

    # Tiny weights: bf16 for the MXU; biases stay f32 (f32 VPU math on v5e).
    w1 = params["w1"].astype(jnp.bfloat16)
    w2 = params["w2"].astype(jnp.bfloat16)
    b1 = params["b1"].astype(jnp.float32)
    b2 = params["b2"].astype(jnp.float32)
    # Layer-3 weight/bias padded to c_pad classes and transposed for the
    # (C_pad, tile_b) output formulation.
    w3t = jnp.pad(params["w3"], ((0, 0), (0, c_pad - num_classes))).T.astype(jnp.bfloat16)
    b3t = jnp.pad(params["b3"], ((0, 0), (0, c_pad - num_classes))).T.astype(jnp.float32)

    grid = (b_pad // tile_b,)
    const = lambda i: (0, 0)  # weights/biases: same (only) block every step

    out_cn = pl.pallas_call(
        tracknet_kernel,
        out_shape=jax.ShapeDtypeStruct((c_pad, b_pad), jnp.float32),
        grid_spec=pltpu.PrefetchScalarGridSpec(
            num_scalar_prefetch=0,
            grid=grid,
            in_specs=[
                pl.BlockSpec((tile_b, input_dim), lambda i: (i, 0)),  # streamed x (f32)
                pl.BlockSpec((input_dim, hidden), const),             # w1 (resident)
                pl.BlockSpec((1, hidden), const),                     # b1
                pl.BlockSpec((hidden, hidden), const),                # w2
                pl.BlockSpec((1, hidden), const),                     # b2
                pl.BlockSpec((c_pad, hidden), const),                 # w3^T (padded)
                pl.BlockSpec((c_pad, 1), const),                      # b3^T (padded)
            ],
            out_specs=pl.BlockSpec((c_pad, tile_b), lambda i: (0, i)),
        ),
        compiler_params=pltpu.CompilerParams(
            dimension_semantics=("parallel",),       # shard batch tiles over TCs
            vmem_limit_bytes=VMEM_LIMIT_BYTES,       # room for f32 h1/h2 at big tiles
        ),
    )(x_p, w1, b1, w2, b2, w3t, b3t)

    # Drop class padding / batch padding and restore (B, num_classes) layout.
    return out_cn[:num_classes, :B].T


def init_params(key, input_dim, hidden_dim=64, num_classes=3):
    """Deterministic synthetic parameters (PyTorch-Linear-like uniform init)."""
    ks = jax.random.split(key, 6)

    def lin(kw, kb, fan_in, fan_out):
        bound = 1.0 / jnp.sqrt(fan_in)
        w = jax.random.uniform(kw, (fan_in, fan_out), jnp.float32, -bound, bound)
        b = jax.random.uniform(kb, (1, fan_out), jnp.float32, -bound, bound)
        return w, b

    w1, b1 = lin(ks[0], ks[1], input_dim, hidden_dim)
    w2, b2 = lin(ks[2], ks[3], hidden_dim, hidden_dim)
    w3, b3 = lin(ks[4], ks[5], hidden_dim, num_classes)
    return {"w1": w1, "b1": b1, "w2": w2, "b2": b2, "w3": w3, "b3": b3}


def tracknet_ref(x, p):
    """Reference mirroring the kernel's bf16 input/weight quantization, f32 math."""
    q = lambda a: a.astype(jnp.bfloat16).astype(jnp.float32)
    h1 = jnp.maximum(q(x) @ q(p["w1"]) + p["b1"], 0.0)
    h2 = jnp.maximum(q(h1) @ q(p["w2"]) + p["b2"], 0.0)
    return q(h2) @ q(p["w3"]) + p["b3"]


def tracknet_ref_f32(x, p):
    """Pure-f32 reference (loose check: bf16 streaming costs a little accuracy)."""
    h1 = jnp.maximum(x @ p["w1"] + p["b1"], 0.0)
    h2 = jnp.maximum(h1 @ p["w2"] + p["b2"], 0.0)
    return h2 @ p["w3"] + p["b3"]


if __name__ == "__main__":
    key = jax.random.PRNGKey(0)
    k_x, k_p = jax.random.split(key)

    batch, input_dim, hidden_dim, num_classes = 8, 16, 64, 3
    x = jax.random.normal(k_x, (batch, input_dim), jnp.float32)
    params = init_params(k_p, input_dim, hidden_dim, num_classes)

    out = jax.block_until_ready(tracknet_forward(x, params))

    assert out.shape == (batch, num_classes), out.shape
    ref_q = tracknet_ref(x, params)
    assert jnp.allclose(out, ref_q, atol=3e-3, rtol=3e-3), "mismatch vs bf16-quantized ref"
    ref_f = tracknet_ref_f32(x, params)
    assert jnp.allclose(out, ref_f, atol=5e-2, rtol=5e-2), "mismatch vs f32 ref"

    print("KERNEL_OK")
</pallas_src>

<mosaic_0001>
module attributes {stable_mosaic.version = 11 : i64} {
  func.func @tracknet_kernel(%arg0: i32, %arg1: memref<16x16xf32, #tpu.memory_space<vmem>>, %arg2: memref<16x64xbf16, #tpu.memory_space<vmem>>, %arg3: memref<1x64xf32, #tpu.memory_space<vmem>>, %arg4: memref<64x64xbf16, #tpu.memory_space<vmem>>, %arg5: memref<1x64xf32, #tpu.memory_space<vmem>>, %arg6: memref<8x64xbf16, #tpu.memory_space<vmem>>, %arg7: memref<8x1xf32, #tpu.memory_space<vmem>>, %arg8: memref<8x16xf32, #tpu.memory_space<vmem>>) attributes {dimension_semantics = [#tpu.dimension_semantics<parallel>], iteration_bounds = array<i64: 1>, scalar_prefetch = 0 : i64, scratch_operands = 0 : i64, tpu.core_type = #tpu.core_type<tc>, window_params = [{transform_indices = @transform_0, window_bounds = array<i64: 16, 16>}, {pipeline_mode = #tpu.pipeline_mode<synchronous>, transform_indices = @transform_1, window_bounds = array<i64: 16, 64>}, {pipeline_mode = #tpu.pipeline_mode<synchronous>, transform_indices = @transform_2, window_bounds = array<i64: 1, 64>}, {pipeline_mode = #tpu.pipeline_mode<synchronous>, transform_indices = @transform_3, window_bounds = array<i64: 64, 64>}, {pipeline_mode = #tpu.pipeline_mode<synchronous>, transform_indices = @transform_4, window_bounds = array<i64: 1, 64>}, {pipeline_mode = #tpu.pipeline_mode<synchronous>, transform_indices = @transform_5, window_bounds = array<i64: 8, 64>}, {pipeline_mode = #tpu.pipeline_mode<synchronous>, transform_indices = @transform_6, window_bounds = array<i64: 8, 1>}, {transform_indices = @transform_7, window_bounds = array<i64: 8, 16>}]} {
    %c0 = arith.constant 0 : index
    %c0_0 = arith.constant 0 : index
    %0 = vector.load %arg1[%c0, %c0_0] : memref<16x16xf32, #tpu.memory_space<vmem>>, vector<16x16xf32>
    %1 = arith.truncf %0 : vector<16x16xf32> to vector<16x16xbf16>
    %c0_1 = arith.constant 0 : index
    %c0_2 = arith.constant 0 : index
    %2 = vector.load %arg2[%c0_1, %c0_2] : memref<16x64xbf16, #tpu.memory_space<vmem>>, vector<16x64xbf16>
    %cst = arith.constant dense<0.000000e+00> : vector<16x64xf32>
    %3 = tpu.matmul %1, %2, %cst {dimension_numbers = #tpu.dot_dimension_numbers<[1], [0], [0], [1], [0, 0, 1, 1], [], []>} : vector<16x16xbf16>, vector<16x64xbf16>, vector<16x64xf32> -> vector<16x64xf32>
    %c0_3 = arith.constant 0 : index
    %c0_4 = arith.constant 0 : index
    %4 = vector.load %arg3[%c0_3, %c0_4] : memref<1x64xf32, #tpu.memory_space<vmem>>, vector<1x64xf32>
    %5 = vector.broadcast %4 : vector<1x64xf32> to vector<16x64xf32>
    %6 = arith.addf %3, %5 : vector<16x64xf32>
    %cst_5 = arith.constant 0.000000e+00 : f32
    %7 = vector.broadcast %cst_5 : f32 to vector<16x64xf32>
    %8 = arith.maximumf %6, %7 : vector<16x64xf32>
    %9 = arith.truncf %8 : vector<16x64xf32> to vector<16x64xbf16>
    %c0_6 = arith.constant 0 : index
    %c0_7 = arith.constant 0 : index
    %10 = vector.load %arg4[%c0_6, %c0_7] : memref<64x64xbf16, #tpu.memory_space<vmem>>, vector<64x64xbf16>
    %cst_8 = arith.constant dense<0.000000e+00> : vector<16x64xf32>
    %11 = tpu.matmul %9, %10, %cst_8 {dimension_numbers = #tpu.dot_dimension_numbers<[1], [0], [0], [1], [0, 0, 1, 1], [], []>} : vector<16x64xbf16>, vector<64x64xbf16>, vector<16x64xf32> -> vector<16x64xf32>
    %c0_9 = arith.constant 0 : index
    %c0_10 = arith.constant 0 : index
    %12 = vector.load %arg5[%c0_9, %c0_10] : memref<1x64xf32, #tpu.memory_space<vmem>>, vector<1x64xf32>
    %13 = vector.broadcast %12 : vector<1x64xf32> to vector<16x64xf32>
    %14 = arith.addf %11, %13 : vector<16x64xf32>
    %cst_11 = arith.constant 0.000000e+00 : f32
    %15 = vector.broadcast %cst_11 : f32 to vector<16x64xf32>
    %16 = arith.maximumf %14, %15 : vector<16x64xf32>
    %c0_12 = arith.constant 0 : index
    %c0_13 = arith.constant 0 : index
    %17 = vector.load %arg6[%c0_12, %c0_13] : memref<8x64xbf16, #tpu.memory_space<vmem>>, vector<8x64xbf16>
    %18 = arith.truncf %16 : vector<16x64xf32> to vector<16x64xbf16>
    %cst_14 = arith.constant dense<0.000000e+00> : vector<8x16xf32>
    %19 = tpu.matmul %17, %18, %cst_14 {dimension_numbers = #tpu.dot_dimension_numbers<[1], [1], [0], [0], [0, 0, 1, 0], [], []>} : vector<8x64xbf16>, vector<16x64xbf16>, vector<8x16xf32> -> vector<8x16xf32>
    %c0_15 = arith.constant 0 : index
    %c0_16 = arith.constant 0 : index
    %20 = vector.load %arg7[%c0_15, %c0_16] : memref<8x1xf32, #tpu.memory_space<vmem>>, vector<8x1xf32>
    %21 = vector.broadcast %20 : vector<8x1xf32> to vector<8x16xf32>
    %22 = arith.addf %19, %21 : vector<8x16xf32>
    %c0_17 = arith.constant 0 : index
    %c0_18 = arith.constant 0 : index
    %23 = vector.load %arg8[%c0_17, %c0_18] : memref<8x16xf32, #tpu.memory_space<vmem>>, vector<8x16xf32>
    tpu.vector_store %arg8[%c0_17, %c0_18], %22 {strides = array<i32>} : memref<8x16xf32, #tpu.memory_space<vmem>>, vector<8x16xf32>,
    return
  }
  func.func @transform_0(%arg0: i32) -> (i32, i32) {
    %c0_i32 = arith.constant 0 : i32
    %c0_i32_0 = arith.constant 0 : i32
    return %arg0, %c0_i32 : i32, i32
  }
  func.func @transform_1(%arg0: i32) -> (i32, i32) {
    %c0_i32 = arith.constant 0 : i32
    %c0_i32_0 = arith.constant 0 : i32
    %c0_i32_1 = arith.constant 0 : i32
    return %c0_i32, %c0_i32_0 : i32, i32
  }
  func.func @transform_2(%arg0: i32) -> (i32, i32) {
    %c0_i32 = arith.constant 0 : i32
    %c0_i32_0 = arith.constant 0 : i32
    %c0_i32_1 = arith.constant 0 : i32
    return %c0_i32, %c0_i32_0 : i32, i32
  }
  func.func @transform_3(%arg0: i32) -> (i32, i32) {
    %c0_i32 = arith.constant 0 : i32
    %c0_i32_0 = arith.constant 0 : i32
    %c0_i32_1 = arith.constant 0 : i32
    return %c0_i32, %c0_i32_0 : i32, i32
  }
  func.func @transform_4(%arg0: i32) -> (i32, i32) {
    %c0_i32 = arith.constant 0 : i32
    %c0_i32_0 = arith.constant 0 : i32
    %c0_i32_1 = arith.constant 0 : i32
    return %c0_i32, %c0_i32_0 : i32, i32
  }
  func.func @transform_5(%arg0: i32) -> (i32, i32) {
    %c0_i32 = arith.constant 0 : i32
    %c0_i32_0 = arith.constant 0 : i32
    %c0_i32_1 = arith.constant 0 : i32
    return %c0_i32, %c0_i32_0 : i32, i32
  }
  func.func @transform_6(%arg0: i32) -> (i32, i32) {
    %c0_i32 = arith.constant 0 : i32
    %c0_i32_0 = arith.constant 0 : i32
    %c0_i32_1 = arith.constant 0 : i32
    return %c0_i32, %c0_i32_0 : i32, i32
  }
  func.func @transform_7(%arg0: i32) -> (i32, i32) {
    %c0_i32 = arith.constant 0 : i32
    %c0_i32_0 = arith.constant 0 : i32
    return %c0_i32, %arg0 : i32, i32
  }
}

</mosaic_0001>

<llo_original>
// kernel: tpu_custom_call.1
$region0: #{tpu_custom_call.1}
  #allocation0 [shape = 'u32[]', space=smem, size = 0x4, offset = 0x4, fixed_abs, tag = 'smem constant byte address 0x4 - core index']
  #allocation1 [shape = 'u32[72,128]{1,0:T(1,128)}', space=vmem, size = 0x9000, scoped, tag = 'internal scratch']
  %s0 = inlined_call_operand.hbm [shape: f32[16,16], index: 0, kind: input, shape index: {}]
  %s1 = inlined_call_operand.vmem [shape: bf16[16,64], index: 1, kind: input, shape index: {}]
  %s2 = inlined_call_operand.vmem [shape: f32[1,64], index: 2, kind: input, shape index: {}]
  %s3 = inlined_call_operand.hbm [shape: bf16[64,64], index: 3, kind: input, shape index: {}]
  %s4 = inlined_call_operand.vmem [shape: f32[1,64], index: 4, kind: input, shape index: {}]
  %s5 = inlined_call_operand.hbm [shape: bf16[8,64], index: 5, kind: input, shape index: {}]
  %s6 = inlined_call_operand.vmem [shape: f32[8,1], index: 6, kind: input, shape index: {}]
  %s7 = inlined_call_operand.hbm [shape: f32[8,16], index: 7, kind: output, shape index: {}]
  %s8 = sld [smem:[#allocation0]]
  $region50: #{tpu_custom_call.1} parent=0
    _
  %s10 = ssub.s32 1, %s8
  %s11 = scalar_select 0, %s10, %s8
  $region1: #{tpu_custom_call.1} parent=0
    #allocation2 [shape = 'u8[8192]{0}', space=vmem, size = 0x2000, scoped, tag = 'input window, operand 0, single buffered']
    #allocation3 [shape = 's32[1]{0}', space=sflag, size = 0x4, scoped, tag = 'scoped memory for tpu_custom_call.1']
    #allocation4 [shape = 's32[1]{0}', space=sflag, size = 0x4, scoped, tag = 'scoped memory for tpu_custom_call.1']
    #allocation5 [shape = 'u8[16384]{0}', space=vmem, size = 0x4000, scoped, tag = 'input window, operand 3, single buffered']
    #allocation6 [shape = 's32[1]{0}', space=sflag, size = 0x4, scoped, tag = 'scoped memory for tpu_custom_call.1']
    #allocation7 [shape = 'u8[2048]{0}', space=vmem, size = 0x800, scoped, tag = 'input window, operand 5, single buffered']
    #allocation8 [shape = 'u8[4096]{0}', space=vmem, size = 0x1000, scoped, tag = 'output window, operand 0, single buffered']
    %12 = vsyncpa [#allocation3], 0
    %13 = vsyncpa [#allocation6], 0
    %14 = vsyncpa [#allocation4], 0
    // Predicated region
    $region2: #{tpu_custom_call.1} parent=1 // pred_check
      _
    $region3: #{tpu_custom_call.1} parent=1 // pred_check_branch
      %16 = sbr.rel (0) target = $region5
    $region4: #{tpu_custom_call.1} parent=1 // pred_region
      %18 = vsyncadd [#allocation3], 0
      %s19 = sshll.u32 %s0, 4
      %s20 = int_to_ptr.hbm [resolvable:$true] %s19
      %s21 = sshll.u32 [#allocation2], 4
      %s22 = int_to_ptr.vmem [resolvable:$true] %s21
      %27 = dma.hbm_to_vmem [thread:$0]  %s20, 256, %s22, [#allocation3], 128, 128, 8
    $region5: #{tpu_custom_call.1} parent=1 // pred_fallthru
      _
    // Predicated region
    $region6: #{tpu_custom_call.1} parent=1 // pred_check
      _
    $region7: #{tpu_custom_call.1} parent=1 // pred_check_branch
      %29 = sbr.rel (0) target = $region9
    $region8: #{tpu_custom_call.1} parent=1 // pred_region
      _
    $region9: #{tpu_custom_call.1} parent=1 // pred_fallthru
      _
    // Predicated region
    $region10: #{tpu_custom_call.1} parent=1 // pred_check
      _
    $region11: #{tpu_custom_call.1} parent=1 // pred_check_branch
      %31 = sbr.rel (0) target = $region13
    $region12: #{tpu_custom_call.1} parent=1 // pred_region
      _
    $region13: #{tpu_custom_call.1} parent=1 // pred_fallthru
      _
    // Predicated region
    $region14: #{tpu_custom_call.1} parent=1 // pred_check
      _
    $region15: #{tpu_custom_call.1} parent=1 // pred_check_branch
      %33 = sbr.rel (0) target = $region17
    $region16: #{tpu_custom_call.1} parent=1 // pred_region
      %35 = vsyncadd [#allocation6], 0
      %s36 = sshll.u32 %s3, 4
      %s37 = int_to_ptr.hbm [resolvable:$true] %s36
      %s38 = sshll.u32 [#allocation5], 4
      %s39 = int_to_ptr.vmem [resolvable:$true] %s38
      %44 = dma.hbm_to_vmem [thread:$0]  %s37, 512, %s39, [#allocation6], 64, 64, 4
    $region17: #{tpu_custom_call.1} parent=1 // pred_fallthru
      _
    // Predicated region
    $region18: #{tpu_custom_call.1} parent=1 // pred_check
      _
    $region19: #{tpu_custom_call.1} parent=1 // pred_check_branch
      %46 = sbr.rel (0) target = $region21
    $region20: #{tpu_custom_call.1} parent=1 // pred_region
      _
    $region21: #{tpu_custom_call.1} parent=1 // pred_fallthru
      _
    // Predicated region
    $region22: #{tpu_custom_call.1} parent=1 // pred_check
      _
    $region23: #{tpu_custom_call.1} parent=1 // pred_check_branch
      %48 = sbr.rel (0) target = $region25
    $region24: #{tpu_custom_call.1} parent=1 // pred_region
      %50 = vsyncadd [#allocation6], 0
      %s52 = sshll.u32 %s5, 4
      %s53 = int_to_ptr.hbm [resolvable:$true] %s52
      %s54 = sshll.u32 [#allocation7], 4
      %s55 = int_to_ptr.vmem [resolvable:$true] %s54
      %57 = dma.hbm_to_vmem [thread:$0]  %s53, 64, %s55, [#allocation6]
    $region25: #{tpu_custom_call.1} parent=1 // pred_fallthru
      _
    // Predicated region
    $region26: #{tpu_custom_call.1} parent=1 // pred_check
      _
    $region27: #{tpu_custom_call.1} parent=1 // pred_check_branch
      %59 = sbr.rel (0) target = $region29
    $region28: #{tpu_custom_call.1} parent=1 // pred_region
      _
    $region29: #{tpu_custom_call.1} parent=1 // pred_fallthru
      _
    // Predicated region
    $region30: #{tpu_custom_call.1} parent=1 // pred_check
      _
    $region31: #{tpu_custom_call.1} parent=1 // pred_check_branch
      %61 = sbr.rel (0) target = $region33
    $region32: #{tpu_custom_call.1} parent=1 // pred_region
      %63 = dma.done [#allocation3], 256
    $region33: #{tpu_custom_call.1} parent=1 // pred_fallthru
      _
    // Predicated region
    $region34: #{tpu_custom_call.1} parent=1 // pred_check
      _
    $region35: #{tpu_custom_call.1} parent=1 // pred_check_branch
      %65 = sbr.rel (0) target = $region37
    $region36: #{tpu_custom_call.1} parent=1 // pred_region
      %67 = dma.done [#allocation6], 512
    $region37: #{tpu_custom_call.1} parent=1 // pred_fallthru
      _
    // Predicated region
    $region38: #{tpu_custom_call.1} parent=1 // pred_check
      _
    $region39: #{tpu_custom_call.1} parent=1 // pred_check_branch
      %69 = sbr.rel (0) target = $region41
    $region40: #{tpu_custom_call.1} parent=1 // pred_region
      %71 = dma.done [#allocation6], 64
    $region41: #{tpu_custom_call.1} parent=1 // pred_fallthru
      _
    %v73 = vld [vmem:[#allocation2] sm:$0xff]
    %v74 = vld [vmem:[#allocation2 + $0x8] sm:$0xff]
    %v75 = vpack.c.bf16 %v74, %v73
    %v76 = vld [vmem:[%s1] sm:$0xf]
    %v77 = vld [vmem:[%s1 + $0x4] sm:$0xf]
    %v78 = vld [vmem:[%s2] sm:$0x1]
    %v80 = vperm.slane %v78, 0
    %v84 = vunpack.c.l.b16 %v76
    %v85 = vunpack.c.l.b16 %v77
    %v86 = vpack.c.b16 %v85, %v84
    %vm88 = vcmask 130048
    %v90 = vsel %vm88, %v75, 0
    %92 = vmatpush.bf16.msra.mxu0 0
    %93 = vmatpush.bf16.msra.mxu0 0
    %94 = vmatpush.bf16.msra.mxu0 0
    %95 = vmatpush.bf16.msra.mxu0 0
    %96 = vmatpush.bf16.msra.mxu0 0
    %97 = vmatpush.bf16.msra.mxu0 0
    %98 = vmatpush.bf16.msra.mxu0 0
    %99 = vmatpush.bf16.msra.mxu0 %v86
    %100 = vmatmul.bf16.gmra.mxu0 %v90
    %v101 = vpop.f32.mrf.mxu0
    %v102 = vadd.f32 %v80, %v101
    %v103 = vpop.f32.mrf.mxu0
    %v104 = vadd.f32 %v80, %v103
    %105 = vdwg.mxu0
    %v106 = vmax.f32 %v102, 0.0
    %v107 = vmax.f32 %v104, 0.0
    %v108 = vpack.c.bf16 %v107, %v106
    %v109 = vld [vmem:[#allocation5] sm:$0xf]
    %v110 = vld [vmem:[#allocation5 + $0x4] sm:$0xf]
    %v111 = vld [vmem:[#allocation5 + $0x8] sm:$0xf]
    %v112 = vld [vmem:[#allocation5 + $0xc] sm:$0xf]
    %v113 = vld [vmem:[#allocation5 + $0x10] sm:$0xf]
    %v114 = vld [vmem:[#allocation5 + $0x14] sm:$0xf]
    %v115 = vld [vmem:[#allocation5 + $0x18] sm:$0xf]
    %v116 = vld [vmem:[#allocation5 + $0x1c] sm:$0xf]
    %v117 = vld [vmem:[%s4] sm:$0x1]
    %v119 = vperm.slane %v117, 0
    %v129 = vunpack.c.l.b16 %v109
    %v130 = vunpack.c.l.b16 %v110
    %v131 = vunpack.c.l.b16 %v111
    %v132 = vunpack.c.l.b16 %v112
    %v133 = vunpack.c.l.b16 %v113
    %v134 = vunpack.c.l.b16 %v114
    %v135 = vunpack.c.l.b16 %v115
    %v136 = vunpack.c.l.b16 %v116
    %v137 = vpack.c.b16 %v130, %v129
    %v138 = vpack.c.b16 %v132, %v131
    %v139 = vpack.c.b16 %v134, %v133
    %v140 = vpack.c.b16 %v136, %v135
    %vm145 = vcmask 523264
    %v147 = vsel %vm145, %v108, 0
    %149 = vmatpush.bf16.msra.mxu0 0
    %150 = vmatpush.bf16.msra.mxu0 0
    %151 = vmatpush.bf16.msra.mxu0 0
    %152 = vmatpush.bf16.msra.mxu0 0
    %153 = vmatpush.bf16.msra.mxu0 %v140
    %154 = vmatpush.bf16.msra.mxu0 %v139
    %155 = vmatpush.bf16.msra.mxu0 %v138
    %156 = vmatpush.bf16.msra.mxu0 %v137
    %157 = vmatmul.bf16.gmra.mxu0 %v147
    %v158 = vpop.f32.mrf.mxu0
    %v159 = vadd.f32 %v119, %v158
    %v160 = vpop.f32.mrf.mxu0
    %v161 = vadd.f32 %v119, %v160
    %162 = vdwg.mxu0
    %v163 = vmax.f32 %v159, 0.0
    %v164 = vmax.f32 %v161, 0.0
    %v165 = vld [vmem:[#allocation7] sm:$0xf]
    %v166 = vpack.c.bf16 %v164, %v163
    %v167 = vld [vmem:[%s6] sm:$0xff]
    %169 = vset.pattern.permute.xlu0 0
    %170 = vperm.xlu0 %169, %v167
    %v171 = vpop.permute.xlu0 %170
    %v174 = vsel %vm145, %v165, 0
    %v177 = vsel %vm145, %v166, 0
    %179 = vmatpush.bf16.xpose.msra.mxu0 0
    %180 = vmatpush.bf16.xpose.msra.mxu0 0
    %181 = vmatpush.bf16.xpose.msra.mxu0 0
    %182 = vmatpush.bf16.xpose.msra.mxu0 0
    %183 = vmatpush.bf16.xpose.msra.mxu0 0
    %184 = vmatpush.bf16.xpose.msra.mxu0 0
    %185 = vmatpush.bf16.xpose.msra.mxu0 0
    %186 = vmatpush.bf16.xpose.msra.mxu0 %v177
    %187 = vmatmul.bf16.gmra.mxu0 %v174
    %v188 = vpop.f32.mrf.mxu0
    %v189 = vadd.f32 %v171, %v188
    %v190 = vpop.f32.mrf.mxu0
    %191 = vdwg.mxu0
    %192 = vst.msk [vmem:[#allocation8] sm:$0xff] %vm88, %v189
    // Predicated region
    $region42: #{tpu_custom_call.1} parent=1 // pred_check
      _
    $region43: #{tpu_custom_call.1} parent=1 // pred_check_branch
      %194 = sbr.rel (0) target = $region45
    $region44: #{tpu_custom_call.1} parent=1 // pred_region
      %196 = vsyncadd [#allocation4], 0
      %s198 = sshll.u32 [#allocation8], 4
      %s199 = int_to_ptr.vmem [resolvable:$true] %s198
      %s200 = sshll.u32 %s7, 4
      %s201 = int_to_ptr.hbm [resolvable:$true] %s200
      %203 = dma.vmem_to_hbm [thread:$0]  %s199, 128, %s201, [#allocation4]
    $region45: #{tpu_custom_call.1} parent=1 // pred_fallthru
      _
    // Predicated region
    $region46: #{tpu_custom_call.1} parent=1 // pred_check
      _
    $region47: #{tpu_custom_call.1} parent=1 // pred_check_branch
      %205 = sbr.rel (0) target = $region49
    $region48: #{tpu_custom_call.1} parent=1 // pred_region
      %207 = dma.done [#allocation4], 128
    $region49: #{tpu_custom_call.1} parent=1 // pred_fallthru
      _
    %208 = vsyncpa [#allocation3], 1
    %209 = vsyncpa [#allocation6], 1
    %210 = vsyncpa [#allocation4], 1

</llo_original>
